<compile_context>
chip_gen: v7x
topology: tpu7x:2x2x1
jax: 0.10.0
libtpu: 0.0.40
codegen_flags: <defaults>
</compile_context>

<pallas_src>
import functools

import jax
import jax.numpy as jnp
from jax import lax
from jax.experimental import pallas as pl
from jax.experimental.pallas import tpu as pltpu

EPS = 1e-5
_LANE = 128
_VMEM_LIMIT_BYTES = 32 * 1024 * 1024      # explicit; >= default on all gens, << physical
_TARGET_BLOCK_BYTES = 1 << 20             # ~1 MiB per-step DMA target
_FUSED_MAX_SLAB_BYTES = 2 << 20           # above this, use the two-pass tiled path


def _round_up(x, m):
    return (x + m - 1) // m * m


def _largest_divisor_leq(n, cap):
    cap = max(1, min(n, cap))
    for d in range(cap, 0, -1):
        if n % d == 0:
            return d
    return 1


def _x_tile_spec(c, t_tile, depth=3):
    """Lane-dense (1, C, tT) input tile; 3-deep buffered when supported."""
    idx = lambda n, k: (n, 0, k)
    try:
        return pl.BlockSpec((1, c, t_tile), idx, pipeline_mode=pl.Buffered(depth))
    except Exception:  # older jax without pipeline_mode -> default double buffering
        return pl.BlockSpec((1, c, t_tile), idx)


# --------------------------- kernels ---------------------------

def _gln_fused_kernel(x_ref, wb_ref, o_ref, *, eps, inv_cnt):
    """Single-read GlobalLayerNorm on an (Nb, C, Tpad) slab."""
    x = x_ref[...].astype(jnp.float32)                          # (Nb, C, Tp)

    # per-batch-element stats in f32 (XLU reduces; single pass over the slab)
    s = jnp.sum(jnp.sum(x, axis=2, keepdims=True), axis=1, keepdims=True)
    ss = jnp.sum(jnp.sum(x * x, axis=2, keepdims=True), axis=1, keepdims=True)
    mean = s * inv_cnt                                           # (Nb, 1, 1)
    var = jnp.maximum(ss * inv_cnt - mean * mean, 0.0)
    scale = lax.rsqrt(var + eps)                                 # EUP

    # fold affine: y = x*a + b  (2 VPU ops / element)
    a = wb_ref[0][None] * scale                                  # (Nb, C, 1)
    b = wb_ref[1][None] - mean * a                               # (Nb, C, 1)
    y = x_ref[...].astype(jnp.float32)                           # re-read: bounded live range
    o_ref[...] = (y * a + b).astype(o_ref.dtype)


def _gln_stats_kernel(x_ref, st_ref):
    """Pass 1: accumulate per-batch sum / sum-of-squares across T tiles."""
    @pl.when(pl.program_id(1) == 0)
    def _():
        st_ref[...] = jnp.zeros_like(st_ref)

    x = x_ref[0].astype(jnp.float32)                             # (C, tT)
    st_ref[0, 0] += jnp.sum(x)                                   # scalar -> (8,128) broadcast
    st_ref[0, 1] += jnp.sum(x * x)


def _gln_norm_kernel(x_ref, ab_ref, o_ref):
    """Pass 2: streaming y = x*a + b with per-(batch, channel) a/b."""
    a = ab_ref[0, 0]                                             # (C, 1)
    b = ab_ref[0, 1]                                             # (C, 1)
    o_ref[0] = (x_ref[0].astype(jnp.float32) * a + b).astype(o_ref.dtype)


# --------------------------- wrapper ---------------------------

def global_layer_norm(x, weight=None, bias=None, *, eps=EPS,
                      force_two_pass=False, t_tile=None):
    """GlobalLayerNorm.forward.  x: (N, C, T); weight/bias: (1, C, 1) or None."""
    N, C, T = x.shape
    itemsize = x.dtype.itemsize

    if weight is None:                                           # elementwise_affine=False
        weight = jnp.ones((1, C, 1), jnp.float32)
    if bias is None:
        bias = jnp.zeros((1, C, 1), jnp.float32)
    w = weight.reshape(1, C, 1).astype(jnp.float32)
    b0 = bias.reshape(1, C, 1).astype(jnp.float32)

    inv_cnt = 1.0 / float(C * T)
    compiler = lambda sem: pltpu.CompilerParams(
        dimension_semantics=sem, vmem_limit_bytes=_VMEM_LIMIT_BYTES)

    slab_bytes = C * _round_up(T, _LANE) * itemsize
    use_two_pass = force_two_pass or slab_bytes > _FUSED_MAX_SLAB_BYTES

    if not use_two_pass:
        # ---------------- fused single-read path ----------------
        Tp = _round_up(T, _LANE)
        xp = x if Tp == T else jnp.pad(x, ((0, 0), (0, 0), (0, Tp - T)))
        nb = _largest_divisor_leq(N, max(1, _TARGET_BLOCK_BYTES // max(slab_bytes, 1)))
        wb = jnp.concatenate([w, b0], axis=0)                    # (2, C, 1) packed params

        kernel = functools.partial(_gln_fused_kernel, eps=float(eps), inv_cnt=inv_cnt)
        out = pl.pallas_call(
            kernel,
            out_shape=jax.ShapeDtypeStruct((N, C, Tp), x.dtype),
            grid=(N // nb,),
            in_specs=[
                pl.BlockSpec((nb, C, Tp), lambda n: (n, 0, 0)),
                pl.BlockSpec((2, C, 1), lambda n: (0, 0, 0)),
            ],
            out_specs=pl.BlockSpec((nb, C, Tp), lambda n: (n, 0, 0)),
            compiler_params=compiler(("parallel",)),
        )(xp, wb)
        return out if Tp == T else out[:, :, :T]

    # ---------------- two-pass T-tiled path ----------------
    if t_tile is None:
        t_tile = max(_LANE,
                     (_TARGET_BLOCK_BYTES // max(C * itemsize, 1)) // _LANE * _LANE)
        t_tile = min(t_tile, _round_up(T, _LANE))
    t_tile = _round_up(int(t_tile), _LANE)
    Tp = _round_up(T, t_tile)
    xp = x if Tp == T else jnp.pad(x, ((0, 0), (0, 0), (0, Tp - T)))
    n_t = Tp // t_tile

    # Pass 1: per-batch sum / sum-sq (zero padding contributes nothing; we
    # divide by the true element count below).
    st = pl.pallas_call(
        _gln_stats_kernel,
        out_shape=jax.ShapeDtypeStruct((N, 2, 8, _LANE), jnp.float32),
        grid=(N, n_t),
        in_specs=[_x_tile_spec(C, t_tile)],
        out_specs=pl.BlockSpec((1, 2, 8, _LANE), lambda n, k: (n, 0, 0, 0)),
        compiler_params=compiler(("parallel", "arbitrary")),
    )(xp)

    # Tiny JAX glue: fold stats + affine into per-(batch, channel) a/b vectors.
    s, ss = st[:, 0, 0, 0], st[:, 1, 0, 0]                       # (N,)
    mean = s * inv_cnt
    var = jnp.maximum(ss * inv_cnt - mean * mean, 0.0)
    scale = lax.rsqrt(var + float(eps))
    a = w * scale[:, None, None]                                 # (N, C, 1)
    bb = b0 - mean[:, None, None] * a                            # (N, C, 1)
    ab = jnp.stack([a, bb], axis=1)                              # (N, 2, C, 1)

    # Pass 2: streaming normalize.
    out = pl.pallas_call(
        _gln_norm_kernel,
        out_shape=jax.ShapeDtypeStruct((N, C, Tp), x.dtype),
        grid=(N, n_t),
        in_specs=[
            _x_tile_spec(C, t_tile),
            pl.BlockSpec((1, 2, C, 1), lambda n, k: (n, 0, 0, 0)),
        ],
        out_specs=pl.BlockSpec((1, C, t_tile), lambda n, k: (n, 0, k)),
        compiler_params=compiler(("parallel", "parallel")),
    )(xp, ab)
    return out if Tp == T else out[:, :, :T]


# ---------------- pure-JAX reference (matches the PyTorch module) ----------------
def ref_gln(x, weight, bias, eps=EPS):
    x = x.astype(jnp.float32)
    mean = jnp.mean(x, axis=(1, 2), keepdims=True)
    var = jnp.mean((x - mean) ** 2, axis=(1, 2), keepdims=True)
    return weight * (x - mean) / jnp.sqrt(var + eps) + bias


if __name__ == "__main__":
    key = jax.random.PRNGKey(0)
    kx, kw, kb = jax.random.split(key, 3)

    C = 16
    weight = 1.0 + 0.1 * jax.random.normal(kw, (1, C, 1), jnp.float32)
    bias = 0.1 * jax.random.normal(kb, (1, C, 1), jnp.float32)

    def check(name, x, atol, **kw):
        out = jax.block_until_ready(global_layer_norm(x, weight, bias, **kw))
        ref = ref_gln(x, weight, bias).astype(x.dtype)
        assert out.shape == x.shape and out.dtype == x.dtype, name
        err = float(jnp.max(jnp.abs(out.astype(jnp.float32) - ref.astype(jnp.float32))))
        assert err <= atol, f"{name}: max abs err {err} > {atol}"

    # (A) small slab -> fused single-read path (2 batch elements per grid step)
    x_a = jax.random.normal(kx, (2, C, 256), jnp.float32)
    check("fused_f32", x_a, 1e-4)

    # (B) forced two-pass tiled path; T=300 exercises lane padding and the
    #     stats accumulator across 3 T-tiles.
    x_b = jax.random.normal(kx, (2, C, 300), jnp.float32)
    check("two_pass_f32", x_b, 1e-4, force_two_pass=True, t_tile=128)

    # (C) bf16 I/O through both two-pass kernels (f32 math inside).
    x_c = jax.random.normal(kx, (2, C, 256), jnp.bfloat16)
    check("two_pass_bf16", x_c, 6e-2, force_two_pass=True, t_tile=128)

    print("KERNEL_OK")
</pallas_src>

<mosaic_0001>
module attributes {stable_mosaic.version = 11 : i64} {
  func.func @_gln_fused_kernel(%arg0: i32, %arg1: memref<2x16x256xf32, #tpu.memory_space<vmem>>, %arg2: memref<2x16x1xf32, #tpu.memory_space<vmem>>, %arg3: memref<2x16x256xf32, #tpu.memory_space<vmem>>) attributes {dimension_semantics = [#tpu.dimension_semantics<parallel>], iteration_bounds = array<i64: 1>, scalar_prefetch = 0 : i64, scratch_operands = 0 : i64, tpu.core_type = #tpu.core_type<tc>, window_params = [{transform_indices = @transform_0, window_bounds = array<i64: 2, 16, 256>}, {pipeline_mode = #tpu.pipeline_mode<synchronous>, transform_indices = @transform_1, window_bounds = array<i64: 2, 16, 1>}, {transform_indices = @transform_2, window_bounds = array<i64: 2, 16, 256>}]} {
    %c0 = arith.constant 0 : index
    %c0_0 = arith.constant 0 : index
    %c0_1 = arith.constant 0 : index
    %0 = vector.load %arg1[%c0, %c0_0, %c0_1] : memref<2x16x256xf32, #tpu.memory_space<vmem>>, vector<2x16x256xf32>
    %cst = arith.constant dense<0.000000e+00> : vector<2x16xf32>
    %1 = vector.multi_reduction <add>, %0, %cst [2] : vector<2x16x256xf32> to vector<2x16xf32>
    %2 = vector.shape_cast %1 : vector<2x16xf32> to vector<2x16x1xf32>
    %cst_2 = arith.constant dense<0.000000e+00> : vector<2x1xf32>
    %3 = vector.multi_reduction <add>, %2, %cst_2 [1] : vector<2x16x1xf32> to vector<2x1xf32>
    %4 = vector.shape_cast %3 : vector<2x1xf32> to vector<2x1x1xf32>
    %5 = arith.mulf %0, %0 : vector<2x16x256xf32>
    %cst_3 = arith.constant dense<0.000000e+00> : vector<2x16xf32>
    %6 = vector.multi_reduction <add>, %5, %cst_3 [2] : vector<2x16x256xf32> to vector<2x16xf32>
    %7 = vector.shape_cast %6 : vector<2x16xf32> to vector<2x16x1xf32>
    %cst_4 = arith.constant dense<0.000000e+00> : vector<2x1xf32>
    %8 = vector.multi_reduction <add>, %7, %cst_4 [1] : vector<2x16x1xf32> to vector<2x1xf32>
    %9 = vector.shape_cast %8 : vector<2x1xf32> to vector<2x1x1xf32>
    %cst_5 = arith.constant 2.44140625E-4 : f32
    %10 = vector.broadcast %cst_5 : f32 to vector<2x1x1xf32>
    %11 = arith.mulf %4, %10 : vector<2x1x1xf32>
    %cst_6 = arith.constant 2.44140625E-4 : f32
    %12 = vector.broadcast %cst_6 : f32 to vector<2x1x1xf32>
    %13 = arith.mulf %9, %12 : vector<2x1x1xf32>
    %14 = arith.mulf %11, %11 : vector<2x1x1xf32>
    %15 = arith.subf %13, %14 : vector<2x1x1xf32>
    %cst_7 = arith.constant 0.000000e+00 : f32
    %16 = vector.broadcast %cst_7 : f32 to vector<2x1x1xf32>
    %17 = arith.maximumf %15, %16 : vector<2x1x1xf32>
    %cst_8 = arith.constant 9.99999974E-6 : f32
    %18 = vector.broadcast %cst_8 : f32 to vector<2x1x1xf32>
    %19 = arith.addf %17, %18 : vector<2x1x1xf32>
    %20 = math.rsqrt %19 : vector<2x1x1xf32>
    %c0_9 = arith.constant 0 : index
    %c0_10 = arith.constant 0 : index
    %c0_11 = arith.constant 0 : index
    %21 = vector.load %arg2[%c0_9, %c0_10, %c0_11] : memref<2x16x1xf32, #tpu.memory_space<vmem>>, vector<1x16x1xf32>
    %22 = vector.shape_cast %21 : vector<1x16x1xf32> to vector<16x1xf32>
    %23 = vector.shape_cast %22 : vector<16x1xf32> to vector<1x16x1xf32>
    %24 = vector.broadcast %23 : vector<1x16x1xf32> to vector<2x16x1xf32>
    %25 = vector.broadcast %20 : vector<2x1x1xf32> to vector<2x16x1xf32>
    %26 = arith.mulf %24, %25 : vector<2x16x1xf32>
    %c1 = arith.constant 1 : index
    %c0_12 = arith.constant 0 : index
    %c0_13 = arith.constant 0 : index
    %27 = vector.load %arg2[%c1, %c0_12, %c0_13] : memref<2x16x1xf32, #tpu.memory_space<vmem>>, vector<1x16x1xf32>
    %28 = vector.shape_cast %27 : vector<1x16x1xf32> to vector<16x1xf32>
    %29 = vector.shape_cast %28 : vector<16x1xf32> to vector<1x16x1xf32>
    %30 = vector.broadcast %11 : vector<2x1x1xf32> to vector<2x16x1xf32>
    %31 = arith.mulf %30, %26 : vector<2x16x1xf32>
    %32 = vector.broadcast %29 : vector<1x16x1xf32> to vector<2x16x1xf32>
    %33 = arith.subf %32, %31 : vector<2x16x1xf32>
    %c0_14 = arith.constant 0 : index
    %c0_15 = arith.constant 0 : index
    %c0_16 = arith.constant 0 : index
    %34 = vector.load %arg1[%c0_14, %c0_15, %c0_16] : memref<2x16x256xf32, #tpu.memory_space<vmem>>, vector<2x16x256xf32>
    %35 = vector.broadcast %26 : vector<2x16x1xf32> to vector<2x16x256xf32>
    %36 = arith.mulf %34, %35 : vector<2x16x256xf32>
    %37 = vector.broadcast %33 : vector<2x16x1xf32> to vector<2x16x256xf32>
    %38 = arith.addf %36, %37 : vector<2x16x256xf32>
    %c0_17 = arith.constant 0 : index
    %c0_18 = arith.constant 0 : index
    %c0_19 = arith.constant 0 : index
    %39 = vector.load %arg3[%c0_17, %c0_18, %c0_19] : memref<2x16x256xf32, #tpu.memory_space<vmem>>, vector<2x16x256xf32>
    tpu.vector_store %arg3[%c0_17, %c0_18, %c0_19], %38 {strides = array<i32>} : memref<2x16x256xf32, #tpu.memory_space<vmem>>, vector<2x16x256xf32>,
    return
  }
  func.func @transform_0(%arg0: i32) -> (i32, i32, i32) {
    %c0_i32 = arith.constant 0 : i32
    %c0_i32_0 = arith.constant 0 : i32
    %c0_i32_1 = arith.constant 0 : i32
    return %arg0, %c0_i32, %c0_i32_0 : i32, i32, i32
  }
  func.func @transform_1(%arg0: i32) -> (i32, i32, i32) {
    %c0_i32 = arith.constant 0 : i32
    %c0_i32_0 = arith.constant 0 : i32
    %c0_i32_1 = arith.constant 0 : i32
    %c0_i32_2 = arith.constant 0 : i32
    return %c0_i32, %c0_i32_0, %c0_i32_1 : i32, i32, i32
  }
  func.func @transform_2(%arg0: i32) -> (i32, i32, i32) {
    %c0_i32 = arith.constant 0 : i32
    %c0_i32_0 = arith.constant 0 : i32
    %c0_i32_1 = arith.constant 0 : i32
    return %arg0, %c0_i32, %c0_i32_0 : i32, i32, i32
  }
}

</mosaic_0001>

<llo_original>
// kernel: tpu_custom_call.1
$region0: #{tpu_custom_call.1}
  #allocation0 [shape = 'u32[]', space=smem, size = 0x4, offset = 0x4, fixed_abs, tag = 'smem constant byte address 0x4 - core index']
  #allocation1 [shape = 'u32[144,128]{1,0:T(1,128)}', space=vmem, size = 0x12000, scoped, tag = 'internal scratch']
  %s0 = inlined_call_operand.hbm [shape: f32[2,16,256], index: 0, kind: input, shape index: {}]
  %s1 = inlined_call_operand.vmem [shape: f32[2,16,1], index: 1, kind: input, shape index: {}]
  %s2 = inlined_call_operand.hbm [shape: f32[2,16,256], index: 2, kind: output, shape index: {}]
  %s3 = sld [smem:[#allocation0]]
  $region22: #{tpu_custom_call.1} parent=0
    _
  %s5 = ssub.s32 1, %s3
  %s6 = scalar_select 0, %s5, %s3
  $region1: #{tpu_custom_call.1} parent=0
    #allocation2 [shape = 'u8[32768]{0}', space=vmem, size = 0x8000, scoped, tag = 'input window, operand 0, single buffered']
    #allocation3 [shape = 's32[1]{0}', space=sflag, size = 0x4, scoped, tag = 'scoped memory for tpu_custom_call.1']
    #allocation4 [shape = 's32[1]{0}', space=sflag, size = 0x4, scoped, tag = 'scoped memory for tpu_custom_call.1']
    #allocation5 [shape = 'u8[32768]{0}', space=vmem, size = 0x8000, scoped, tag = 'output window, operand 0, single buffered']
    %7 = vsyncpa [#allocation3], 0
    %8 = vsyncpa [#allocation4], 0
    // Predicated region
    $region2: #{tpu_custom_call.1} parent=1 // pred_check
      _
    $region3: #{tpu_custom_call.1} parent=1 // pred_check_branch
      %10 = sbr.rel (0) target = $region5
    $region4: #{tpu_custom_call.1} parent=1 // pred_region
      %s12 = ssub.s32 1024, 1024
      %13 = vsyncadd [#allocation3], %s12
      %s14 = sshll.u32 [#allocation2], 4
      %s15 = int_to_ptr.vmem [resolvable:$true] %s14
      %20 = dma.hbm_to_vmem [thread:$0]  %s0, 1024, %s15, [#allocation3], 256, 256, 16
    $region5: #{tpu_custom_call.1} parent=1 // pred_fallthru
      _
    // Predicated region
    $region6: #{tpu_custom_call.1} parent=1 // pred_check
      _
    $region7: #{tpu_custom_call.1} parent=1 // pred_check_branch
      %22 = sbr.rel (0) target = $region9
    $region8: #{tpu_custom_call.1} parent=1 // pred_region
      _
    $region9: #{tpu_custom_call.1} parent=1 // pred_fallthru
      _
    // Predicated region
    $region10: #{tpu_custom_call.1} parent=1 // pred_check
      _
    $region11: #{tpu_custom_call.1} parent=1 // pred_check_branch
      %24 = sbr.rel (0) target = $region13
    $region12: #{tpu_custom_call.1} parent=1 // pred_region
      %25 = dma.done [#allocation3], 1024
    $region13: #{tpu_custom_call.1} parent=1 // pred_fallthru
      _
    %v26 = vld [vmem:[#allocation2] sm:$0xff]
    %v27 = vld [vmem:[#allocation2 + $0x8] sm:$0xff]
    %v28 = vld [vmem:[#allocation2 + $0x10] sm:$0xff]
    %v29 = vld [vmem:[#allocation2 + $0x18] sm:$0xff]
    %v30 = vld [vmem:[#allocation2 + $0x20] sm:$0xff]
    %v31 = vld [vmem:[#allocation2 + $0x28] sm:$0xff]
    %v32 = vld [vmem:[#allocation2 + $0x30] sm:$0xff]
    %v33 = vld [vmem:[#allocation2 + $0x38] sm:$0xff]
    %v34 = vadd.f32 %v26, %v27
    %35 = vadd.xlane.f32.xlu0 %v34
    %v36 = vpop.xlane.xlu0 %35
    %v37 = vadd.f32 %v28, %v29
    %38 = vadd.xlane.f32.xlu0 %v37
    %v39 = vpop.xlane.xlu0 %38
    %v40 = vadd.f32 %v30, %v31
    %41 = vadd.xlane.f32.xlu0 %v40
    %v42 = vpop.xlane.xlu0 %41
    %v43 = vadd.f32 %v32, %v33
    %44 = vadd.xlane.f32.xlu0 %v43
    %v45 = vpop.xlane.xlu0 %44
    %v46 = vadd.f32 %v36, %v39
    %v47 = vrot.slane %v46, 4
    %v48 = vadd.f32 %v46, %v47
    %v49 = vrot.slane %v48, 2
    %v50 = vadd.f32 %v48, %v49
    %v51 = vrot.slane %v50, 1
    %v52 = vadd.f32 %v50, %v51
    %v53 = vadd.f32 %v42, %v45
    %v54 = vrot.slane %v53, 4
    %v55 = vadd.f32 %v53, %v54
    %v56 = vrot.slane %v55, 2
    %v57 = vadd.f32 %v55, %v56
    %v58 = vrot.slane %v57, 1
    %v59 = vadd.f32 %v57, %v58
    %v60 = vmul.f32 %v26, %v26
    %v61 = vmul.f32 %v27, %v27
    %v62 = vmul.f32 %v28, %v28
    %v63 = vmul.f32 %v29, %v29
    %v64 = vmul.f32 %v30, %v30
    %v65 = vmul.f32 %v31, %v31
    %v66 = vmul.f32 %v32, %v32
    %v67 = vmul.f32 %v33, %v33
    %v68 = vadd.f32 %v60, %v61
    %69 = vadd.xlane.f32.xlu0 %v68
    %v70 = vpop.xlane.xlu0 %69
    %v71 = vadd.f32 %v62, %v63
    %72 = vadd.xlane.f32.xlu0 %v71
    %v73 = vpop.xlane.xlu0 %72
    %v74 = vadd.f32 %v64, %v65
    %75 = vadd.xlane.f32.xlu0 %v74
    %v76 = vpop.xlane.xlu0 %75
    %v77 = vadd.f32 %v66, %v67
    %78 = vadd.xlane.f32.xlu0 %v77
    %v79 = vpop.xlane.xlu0 %78
    %v80 = vadd.f32 %v70, %v73
    %v81 = vrot.slane %v80, 4
    %v82 = vadd.f32 %v80, %v81
    %v83 = vrot.slane %v82, 2
    %v84 = vadd.f32 %v82, %v83
    %v85 = vrot.slane %v84, 1
    %v86 = vadd.f32 %v84, %v85
    %v87 = vadd.f32 %v76, %v79
    %v88 = vrot.slane %v87, 4
    %v89 = vadd.f32 %v87, %v88
    %v90 = vrot.slane %v89, 2
    %v91 = vadd.f32 %v89, %v90
    %v92 = vrot.slane %v91, 1
    %v93 = vadd.f32 %v91, %v92
    %v94 = vmul.f32 %v52, 0.00024414063
    %v95 = vmul.f32 %v59, 0.00024414063
    %v96 = vmul.f32 %v86, 0.00024414063
    %v97 = vmul.f32 %v93, 0.00024414063
    %v98 = vmul.f32 %v94, %v94
    %v99 = vmul.f32 %v95, %v95
    %v100 = vsub.f32 %v96, %v98
    %v101 = vsub.f32 %v97, %v99
    %v102 = vmax.f32 %v100, 0.0
    %v103 = vmax.f32 %v101, 0.0
    %v104 = vadd.f32 %v102, 1e-05
    %v105 = vadd.f32 %v103, 1e-05
    %v106 = vrsqrt.pop %v104
    %v107 = vrsqrt.pop %v105
    %v108 = vld [vmem:[%s1] sm:$0xff]
    %v109 = vld [vmem:[%s1 + $0x8] sm:$0xff]
    %v110 = vmul.f32 %v108, %v106
    %v111 = vmul.f32 %v109, %v106
    %v112 = vmul.f32 %v108, %v107
    %v113 = vmul.f32 %v109, %v107
    %s114 = scalar_lea.vmem %s1, 16
    %v115 = vld [vmem:[%s114] sm:$0xff]
    %v116 = vld [vmem:[%s114 + $0x8] sm:$0xff]
    %v117 = vmul.f32 %v94, %v110
    %v118 = vmul.f32 %v94, %v111
    %v119 = vmul.f32 %v95, %v112
    %v120 = vmul.f32 %v95, %v113
    %v121 = vsub.f32 %v115, %v117
    %v122 = vsub.f32 %v116, %v118
    %v123 = vsub.f32 %v115, %v119
    %v124 = vsub.f32 %v116, %v120
    %126 = vset.pattern.permute.xlu0 0
    %127 = vperm.xlu0 %126, %v110
    %v128 = vpop.permute.xlu0 %127
    %131 = vset.pattern.permute.xlu0 0
    %132 = vperm.xlu0 %131, %v111
    %v133 = vpop.permute.xlu0 %132
    %136 = vset.pattern.permute.xlu0 0
    %137 = vperm.xlu0 %136, %v112
    %v138 = vpop.permute.xlu0 %137
    %141 = vset.pattern.permute.xlu0 0
    %142 = vperm.xlu0 %141, %v113
    %v143 = vpop.permute.xlu0 %142
    %v145 = vmul.f32 %v26, %v128
    %v146 = vmul.f32 %v27, %v128
    %v147 = vmul.f32 %v28, %v133
    %v148 = vmul.f32 %v29, %v133
    %v149 = vmul.f32 %v30, %v138
    %v150 = vmul.f32 %v31, %v138
    %v151 = vmul.f32 %v32, %v143
    %v152 = vmul.f32 %v33, %v143
    %154 = vset.pattern.permute.xlu0 0
    %155 = vperm.xlu0 %154, %v121
    %v156 = vpop.permute.xlu0 %155
    %159 = vset.pattern.permute.xlu0 0
    %160 = vperm.xlu0 %159, %v122
    %v161 = vpop.permute.xlu0 %160
    %164 = vset.pattern.permute.xlu0 0
    %165 = vperm.xlu0 %164, %v123
    %v166 = vpop.permute.xlu0 %165
    %169 = vset.pattern.permute.xlu0 0
    %170 = vperm.xlu0 %169, %v124
    %v171 = vpop.permute.xlu0 %170
    %v173 = vadd.f32 %v145, %v156
    %v174 = vadd.f32 %v146, %v156
    %v175 = vadd.f32 %v147, %v161
    %v176 = vadd.f32 %v148, %v161
    %v177 = vadd.f32 %v149, %v166
    %v178 = vadd.f32 %v150, %v166
    %v179 = vadd.f32 %v151, %v171
    %v180 = vadd.f32 %v152, %v171
    %181 = vst [vmem:[#allocation5] sm:$0xff] %v173
    %182 = vst [vmem:[#allocation5 + $0x8] sm:$0xff] %v174
    %183 = vst [vmem:[#allocation5 + $0x10] sm:$0xff] %v175
    %184 = vst [vmem:[#allocation5 + $0x18] sm:$0xff] %v176
    %185 = vst [vmem:[#allocation5 + $0x20] sm:$0xff] %v177
    %186 = vst [vmem:[#allocation5 + $0x28] sm:$0xff] %v178
    %187 = vst [vmem:[#allocation5 + $0x30] sm:$0xff] %v179
    %188 = vst [vmem:[#allocation5 + $0x38] sm:$0xff] %v180
    // Predicated region
    $region14: #{tpu_custom_call.1} parent=1 // pred_check
      _
    $region15: #{tpu_custom_call.1} parent=1 // pred_check_branch
      %190 = sbr.rel (0) target = $region17
    $region16: #{tpu_custom_call.1} parent=1 // pred_region
      %s192 = ssub.s32 1024, 1024
      %193 = vsyncadd [#allocation4], %s192
      %s194 = sshll.u32 [#allocation5], 4
      %s195 = int_to_ptr.vmem [resolvable:$true] %s194
      %200 = dma.vmem_to_hbm [thread:$0]  %s195, 1024, %s2, [#allocation4], 256, 256, 16
    $region17: #{tpu_custom_call.1} parent=1 // pred_fallthru
      _
    // Predicated region
    $region18: #{tpu_custom_call.1} parent=1 // pred_check
      _
    $region19: #{tpu_custom_call.1} parent=1 // pred_check_branch
      %202 = sbr.rel (0) target = $region21
    $region20: #{tpu_custom_call.1} parent=1 // pred_region
      %203 = dma.done [#allocation4], 1024
    $region21: #{tpu_custom_call.1} parent=1 // pred_fallthru
      _
    %204 = vsyncpa [#allocation3], 1
    %205 = vsyncpa [#allocation4], 1

</llo_original>
